<compile_context>
chip_gen: v5e
topology: v5e:2x2
jax: 0.10.0
libtpu: 0.0.40
codegen_flags: <defaults>
</compile_context>

<pallas_src>
import functools

import numpy as np
import jax
import jax.numpy as jnp
from jax import lax
from jax.experimental import pallas as pl
from jax.experimental.pallas import tpu as pltpu


def _round_down(x: int, m: int) -> int:
    return (x // m) * m


def _vmem_budget_bytes() -> int:
    """Physical VMEM capacity (generation aware); conservative fallback."""
    try:
        return int(pltpu.get_tpu_info().vmem_capacity_bytes)
    except Exception:
        return 64 * 1024 * 1024  # v7x-safe default


# ----------------------------------------------------------------------------
# Streaming per-graph label-sum kernel: [G, N] -> [G] (single pallas_call).
# ----------------------------------------------------------------------------
@functools.lru_cache(maxsize=None)
def _build_rowsum_call(g: int, n: int, tg_override=None):
    """Returns (pallas_call callable, padded_total) for a [g, n] label array."""
    budget = _vmem_budget_bytes()

    # Row-tile sizing: target multi-MiB int8 blocks (fewer grid steps, better
    # DMA overlap) while keeping double-buffered input + the in-kernel bf16
    # copy well under a quarter of physical VMEM on every generation.
    max_block_bytes = min(4 << 20, budget // 16)
    tg_cap = max(8, max_block_bytes // max(n, 1))
    if tg_override is not None:
        tg = min(int(tg_override), g)      # test hook; must be a multiple of 128
        if tg < g:
            assert tg % 128 == 0
    elif g <= tg_cap:
        tg = g                             # single tile: full-dim block, no ragged tail
    else:
        tg = _round_down(min(tg_cap, 8192), 512)
        tg = max(tg, 128)                  # multiple of 128 (lanes) and 32 (int8 sublanes)
    num_tiles = int(pl.cdiv(g, tg))
    total = num_tiles * tg                 # output columns (cols >= g hold garbage)

    def kernel(lbl_ref, sums_ref):
        # lbl_ref  : VMEM (tg, n)  label indicators, caller dtype (int8 recommended)
        # sums_ref : VMEM (1, tg)  lane-dense per-graph label sums (f32)
        tile = lbl_ref[...].astype(jnp.bfloat16)          # upcast in-kernel, not in wrapper
        ones = jnp.ones((8, n), dtype=jnp.bfloat16)
        # Row reduction on the MXU (NT matmul, flash-attention style):
        #   (8, n) . (tg, n)^T -> (8, tg), every row = the per-graph sums.
        # Keeps the reduce off the VPU/XLU (which would be the bottleneck for
        # a lane-axis jnp.sum) and yields a lane-dense result for free.
        rs = lax.dot_general(ones, tile, (((1,), (1,)), ((), ())),
                             preferred_element_type=jnp.float32)
        sums_ref[...] = rs[0:1, :]

    vmem_needed = (2 * tg * n              # double-buffered int8 input blocks
                   + 2 * tg * n            # in-kernel bf16 copy of one tile
                   + 64 * tg               # MXU result + output double buffer (f32)
                   + (4 << 20))            # compiler / internal scratch headroom
    vmem_limit = int(max(16 << 20, min(max(vmem_needed, 32 << 20), budget - (8 << 20))))

    call = pl.pallas_call(
        kernel,
        out_shape=jax.ShapeDtypeStruct((1, total), jnp.float32),
        grid_spec=pltpu.PrefetchScalarGridSpec(
            num_scalar_prefetch=0,
            grid=(num_tiles,),
            in_specs=[pl.BlockSpec((tg, n), lambda i: (i, 0))],
            out_specs=pl.BlockSpec((1, tg), lambda i: (0, i)),
        ),
        compiler_params=pltpu.CompilerParams(
            # No carried scratch / finalize step -> independent tiles -> both
            # v7x TensorCores can be used.  (v5e/v6e: single TC, no effect.)
            dimension_semantics=("parallel",),
            vmem_limit_bytes=vmem_limit,
        ),
    )
    return call, total


def graph_label_sums(label_node_ids: jax.Array, tg_override=None) -> np.ndarray:
    """label_node_ids: [G, N] 0/1 indicators (int8 recommended; zero past
    num_nodes[g]).  Returns per-graph label sums as a host numpy [G] f32.
    No wrapper-side cast/pad: the array streams through the kernel as-is."""
    g, n = label_node_ids.shape
    call, total = _build_rowsum_call(g, n, tg_override)
    out = call(label_node_ids)             # [1, total] f32; cols >= g are garbage
    return np.asarray(jax.device_get(out))[0, :g]


# ----------------------------------------------------------------------------
# Forward wrapper mirroring NNSubgraphs.forward semantics
# ----------------------------------------------------------------------------
def nn_subgraphs_forward(x, label_node_ids, num_nodes, nn_slices, split="train"):
    """
    x:              [G, N, F] padded node features per graph (stays on device)
    label_node_ids: [G, N]    0/1 padded label-node indicators (zeros past num_nodes)
    num_nodes:      [G]       true node count per graph (tiny metadata)
    nn_slices:      python list of ints (len = num_groups + 1), CSR over graphs
    Returns (batch_dict, new_nn_slices) or (None, None) if everything filtered.
    """
    # TODO(synk): the `val.x is None` branch fetches raw items from
    # dataset_obj.raw_{train,dev,test}_data — host-side dataset lookup with no
    # Pallas equivalent; inputs here are assumed already materialized.
    G, N, F = x.shape
    num_groups = len(nn_slices) - 1
    assert label_node_ids.shape == (G, N)
    assert nn_slices[0] == 0 and nn_slices[-1] <= G
    assert all(nn_slices[i] <= nn_slices[i + 1] for i in range(num_groups))

    sums = None
    if split == "train" and num_groups > 0:
        sums = graph_label_sums(label_node_ids)     # [G] f32 on host (4*G bytes)

    # Host glue on metadata only (mirrors the original python list filtering).
    kept_graph_ids = []
    new_nn_slices = [0]
    for ctr in range(num_groups):
        s, e = nn_slices[ctr], nn_slices[ctr + 1]
        if split == "train":
            if sums[s] == 0.0:                      # query has no label nodes
                continue
            if float(sums[s + 1:e].sum()) == 0.0:   # neighbors (or none) have no labels
                continue
        kept_graph_ids.extend(range(s, e))
        new_nn_slices.append(len(kept_graph_ids))
    assert new_nn_slices[-1] == len(kept_graph_ids)
    if len(kept_graph_ids) == 0:
        return None, None

    # Batch.from_data_list emulation — feature compaction stays ON DEVICE:
    # only small integer metadata (sums, num_nodes, gather indices) touches
    # the host; the [G, N, F] tensor never does.
    nn_host = np.asarray(jax.device_get(num_nodes)).astype(np.int64)
    kept = np.asarray(kept_graph_ids, dtype=np.int64)
    counts = nn_host[kept]
    total_nodes = int(counts.sum())
    if total_nodes > 0:
        flat_idx = np.concatenate(
            [gid * N + np.arange(cnt, dtype=np.int64) for gid, cnt in zip(kept, counts)]
        ).astype(np.int32)
    else:
        flat_idx = np.zeros((0,), dtype=np.int32)

    x_flat = jnp.take(jnp.reshape(x, (G * N, F)), jnp.asarray(flat_idx), axis=0)
    x_batch = jnp.repeat(
        jnp.arange(len(kept), dtype=jnp.int32),
        jnp.asarray(counts, dtype=jnp.int32),
        total_repeat_length=total_nodes,
    )
    batch = {
        "x": x_flat,              # [total_nodes, F], on device
        "x_batch": x_batch,       # [total_nodes],   on device
        "num_graphs": int(len(kept)),
    }
    # TODO(synk): edge_index / edge_attr and follow_batch=['edge_attr'] are not
    # modeled here (no edge tensors in this padded node-feature representation).
    return batch, new_nn_slices


# ----------------------------------------------------------------------------
if __name__ == "__main__":
    key = jax.random.PRNGKey(0)

    # --- Small end-to-end forward check -------------------------------------
    G, N, F = 8, 128, 32            # 8 graphs, 128 padded nodes, 32 feat dims
    nn_slices = [0, 4, 8]           # 2 groups: each a query + 3 KNN graphs

    k_x, k_lbl, k_lbl2 = jax.random.split(key, 3)
    x = jax.random.normal(k_x, (G, N, F), dtype=jnp.float32)
    num_nodes = jnp.array([128, 96, 64, 128, 100, 80, 128, 32], dtype=jnp.int32)
    node_mask = jnp.arange(N)[None, :] < num_nodes[:, None]
    lbl = jax.random.bernoulli(k_lbl, p=0.1, shape=(G, N))
    lbl = jnp.where(node_mask, lbl, False)
    # Guarantee group 0 survives; make group 1's query (graph 4) label-free.
    lbl = lbl.at[0, 0].set(True).at[1, 0].set(True)
    lbl = lbl.at[4].set(False)
    label_node_ids = lbl.astype(jnp.int8)       # streamed as int8 (no wrapper cast)

    batch, new_nn_slices = nn_subgraphs_forward(
        x, label_node_ids, num_nodes, nn_slices, split="train"
    )
    assert batch is not None
    jax.block_until_ready(batch["x"])
    jax.block_until_ready(batch["x_batch"])

    # Host reference of the filtering + re-batching logic.
    lbl_np = np.asarray(jax.device_get(label_node_ids)).astype(np.int64)
    x_np = np.asarray(jax.device_get(x))
    nn_np = np.asarray(jax.device_get(num_nodes))
    sums_ref = lbl_np.sum(axis=1)
    exp_slices, exp_ids = [0], []
    for ctr in range(len(nn_slices) - 1):
        s, e = nn_slices[ctr], nn_slices[ctr + 1]
        if sums_ref[s] == 0:
            continue
        if sums_ref[s + 1:e].sum() == 0:
            continue
        exp_ids.extend(range(s, e))
        exp_slices.append(len(exp_ids))
    assert new_nn_slices == exp_slices, (new_nn_slices, exp_slices)
    assert batch["num_graphs"] == len(exp_ids)
    exp_x = np.concatenate([x_np[gid, : nn_np[gid]] for gid in exp_ids], axis=0)
    exp_b = np.concatenate(
        [np.full((nn_np[gid],), i, dtype=np.int64) for i, gid in enumerate(exp_ids)]
    )
    np.testing.assert_array_equal(np.asarray(batch["x"]), exp_x)
    np.testing.assert_array_equal(np.asarray(batch["x_batch"]), exp_b)

    # --- Multi-tile / ragged-tail kernel check (forced small row tile) ------
    # G2 not a multiple of the tile (last block overhangs), N2 not a multiple
    # of 128 (full-dim lane block); garbage in padded output columns must not
    # leak into the first G2 sums.
    G2, N2 = 700, 160
    lbl2 = jax.random.bernoulli(k_lbl2, p=0.05, shape=(G2, N2)).astype(jnp.int8)
    sums2 = graph_label_sums(lbl2, tg_override=256)     # 3 tiles of 256 rows
    ref2 = np.asarray(jax.device_get(lbl2)).astype(np.int64).sum(axis=1)
    np.testing.assert_array_equal(sums2.astype(np.int64), ref2)

    print("KERNEL_OK")
</pallas_src>

<mosaic_0001>
module attributes {stable_mosaic.version = 11 : i64} {
  func.func @kernel(%arg0: i32, %arg1: memref<8x128xi8, #tpu.memory_space<vmem>>, %arg2: memref<1x8xf32, #tpu.memory_space<vmem>>) attributes {dimension_semantics = [#tpu.dimension_semantics<parallel>], iteration_bounds = array<i64: 1>, scalar_prefetch = 0 : i64, scratch_operands = 0 : i64, tpu.core_type = #tpu.core_type<tc>, window_params = [{transform_indices = @transform_0, window_bounds = array<i64: 8, 128>}, {transform_indices = @transform_1, window_bounds = array<i64: 1, 8>}]} {
    %c0 = arith.constant 0 : index
    %c0_0 = arith.constant 0 : index
    %0 = vector.load %arg1[%c0, %c0_0] : memref<8x128xi8, #tpu.memory_space<vmem>>, vector<8x128xi8>
    %1 = arith.sitofp %0 : vector<8x128xi8> to vector<8x128xbf16>
    %cst = arith.constant 1.000000e+00 : bf16
    %2 = vector.broadcast %cst : bf16 to vector<8x128xbf16>
    %cst_1 = arith.constant dense<0.000000e+00> : vector<8x8xf32>
    %3 = tpu.matmul %2, %1, %cst_1 {dimension_numbers = #tpu.dot_dimension_numbers<[1], [1], [0], [0], [0, 0, 1, 0], [], []>} : vector<8x128xbf16>, vector<8x128xbf16>, vector<8x8xf32> -> vector<8x8xf32>
    %4 = vector.extract_strided_slice %3 {offsets = [0, 0], sizes = [1, 8], strides = [1, 1]} : vector<8x8xf32> to vector<1x8xf32>
    %c0_2 = arith.constant 0 : index
    %c0_3 = arith.constant 0 : index
    %5 = vector.load %arg2[%c0_2, %c0_3] : memref<1x8xf32, #tpu.memory_space<vmem>>, vector<1x8xf32>
    tpu.vector_store %arg2[%c0_2, %c0_3], %4 {strides = array<i32>} : memref<1x8xf32, #tpu.memory_space<vmem>>, vector<1x8xf32>,
    return
  }
  func.func @transform_0(%arg0: i32) -> (i32, i32) {
    %c0_i32 = arith.constant 0 : i32
    %c0_i32_0 = arith.constant 0 : i32
    return %arg0, %c0_i32 : i32, i32
  }
  func.func @transform_1(%arg0: i32) -> (i32, i32) {
    %c0_i32 = arith.constant 0 : i32
    %c0_i32_0 = arith.constant 0 : i32
    return %c0_i32, %arg0 : i32, i32
  }
}

</mosaic_0001>

<llo_original>
// kernel: tpu_custom_call.1
$region0: #{tpu_custom_call.1}
  #allocation0 [shape = 'u32[]', space=smem, size = 0x4, offset = 0x4, fixed_abs, tag = 'smem constant byte address 0x4 - core index']
  #allocation1 [shape = 'u32[72,128]{1,0:T(1,128)}', space=vmem, size = 0x9000, scoped, tag = 'internal scratch']
  %s0 = inlined_call_operand.hbm [shape: s8[8,128], index: 0, kind: input, shape index: {}]
  %s1 = inlined_call_operand.hbm [shape: f32[1,8], index: 1, kind: output, shape index: {}]
  %s2 = sld [smem:[#allocation0]]
  $region18: #{tpu_custom_call.1} parent=0
    _
  %s4 = ssub.s32 1, %s2
  %s5 = scalar_select 0, %s4, %s2
  $region1: #{tpu_custom_call.1} parent=0
    #allocation2 [shape = 'u8[1024]{0}', space=vmem, size = 0x400, scoped, tag = 'input window, operand 0, single buffered']
    #allocation3 [shape = 's32[1]{0}', space=sflag, size = 0x4, scoped, tag = 'scoped memory for tpu_custom_call.1']
    #allocation4 [shape = 's32[1]{0}', space=sflag, size = 0x4, scoped, tag = 'scoped memory for tpu_custom_call.1']
    #allocation5 [shape = 'u8[512]{0}', space=vmem, size = 0x400, scoped, tag = 'output window, operand 0, single buffered']
    %6 = vsyncpa [#allocation3], 0
    %7 = vsyncpa [#allocation4], 0
    // Predicated region
    $region2: #{tpu_custom_call.1} parent=1 // pred_check
      _
    $region3: #{tpu_custom_call.1} parent=1 // pred_check_branch
      %9 = sbr.rel (0) target = $region5
    $region4: #{tpu_custom_call.1} parent=1 // pred_region
      %11 = vsyncadd [#allocation3], 0
      %s13 = sshll.u32 %s0, 4
      %s14 = int_to_ptr.hbm [resolvable:$true] %s13
      %s15 = sshll.u32 [#allocation2], 4
      %s16 = int_to_ptr.vmem [resolvable:$true] %s15
      %18 = dma.hbm_to_vmem [thread:$0]  %s14, 32, %s16, [#allocation3]
    $region5: #{tpu_custom_call.1} parent=1 // pred_fallthru
      _
    // Predicated region
    $region6: #{tpu_custom_call.1} parent=1 // pred_check
      _
    $region7: #{tpu_custom_call.1} parent=1 // pred_check_branch
      %20 = sbr.rel (0) target = $region9
    $region8: #{tpu_custom_call.1} parent=1 // pred_region
      %22 = dma.done [#allocation3], 32
    $region9: #{tpu_custom_call.1} parent=1 // pred_fallthru
      _
    %v25 = vld [vmem:[#allocation2] sm:$0x3]
    %v26 = vunpack.c.0.s8 %v25
    %v27 = vcvt.s32.f32 %v26
    %v28 = vpack.c.bf16 %v27, %v27
    %29 = vmatpush.bf16.xpose.msra.mxu0 0
    %30 = vmatpush.bf16.xpose.msra.mxu0 0
    %31 = vmatpush.bf16.xpose.msra.mxu0 0
    %32 = vmatpush.bf16.xpose.msra.mxu0 0
    %33 = vmatpush.bf16.xpose.msra.mxu0 0
    %34 = vmatpush.bf16.xpose.msra.mxu0 0
    %35 = vmatpush.bf16.xpose.msra.mxu0 0
    %36 = vmatpush.bf16.xpose.msra.mxu0 %v28
    %37 = vmatmul.bf16.gmra.mxu0 1065369472
    %v38 = vpop.f32.mrf.mxu0
    %v39 = vadd.f32 0.0, %v38
    %v40 = vpop.f32.mrf.mxu0
    %41 = vdwg.mxu0
    %vm42 = vcmask 57344
    %43 = vst.msk [vmem:[#allocation5] sm:$0x1] %vm42, %v39
    // Predicated region
    $region10: #{tpu_custom_call.1} parent=1 // pred_check
      _
    $region11: #{tpu_custom_call.1} parent=1 // pred_check_branch
      %45 = sbr.rel (0) target = $region13
    $region12: #{tpu_custom_call.1} parent=1 // pred_region
      %47 = vsyncadd [#allocation4], 0
      %s49 = sshll.u32 [#allocation5], 4
      %s50 = int_to_ptr.vmem [resolvable:$true] %s49
      %s51 = sshll.u32 %s1, 4
      %s52 = int_to_ptr.hbm [resolvable:$true] %s51
      %54 = dma.vmem_to_hbm [thread:$0]  %s50, 16, %s52, [#allocation4]
    $region13: #{tpu_custom_call.1} parent=1 // pred_fallthru
      _
    // Predicated region
    $region14: #{tpu_custom_call.1} parent=1 // pred_check
      _
    $region15: #{tpu_custom_call.1} parent=1 // pred_check_branch
      %56 = sbr.rel (0) target = $region17
    $region16: #{tpu_custom_call.1} parent=1 // pred_region
      %58 = dma.done [#allocation4], 16
    $region17: #{tpu_custom_call.1} parent=1 // pred_fallthru
      _
    %59 = vsyncpa [#allocation3], 1
    %60 = vsyncpa [#allocation4], 1

</llo_original>
